<compile_context>
chip_gen: v7x
topology: tpu7x:2x2x1
jax: 0.10.0
libtpu: 0.0.40
codegen_flags: <defaults>
</compile_context>

<pallas_src>
import functools
import math

import jax
import jax.numpy as jnp
from jax.experimental import pallas as pl
from jax.experimental.pallas import tpu as pltpu


def _round_up(v, mult):
    return ((v + mult - 1) // mult) * mult


def _arcface_kernel(x_ref, w_ref, xinv_ref, winv_ref, lbl_ref, o_ref, *,
                    s, cos_m, sin_m, th, mm, easy_margin):
    # x_ref:    (tile_b, D)   raw features (possibly bf16)
    # w_ref:    (tile_n, D)   raw class weights (possibly bf16)
    # xinv_ref: (tile_b, 1)   f32  1 / max(||x_row||, 1e-12)
    # winv_ref: (1, tile_n)   f32  1 / max(||w_row||, 1e-12)
    # lbl_ref:  (tile_b, 1)   int32 labels
    # o_ref:    (tile_b, tile_n) output logits block
    tile_n = o_ref.shape[1]

    # Raw dot on the MXU, contracting dim 1 of both operands (no transpose).
    raw = jax.lax.dot_general(
        x_ref[...], w_ref[...],
        dimension_numbers=(((1,), (1,)), ((), ())),
        preferred_element_type=jnp.float32)                  # (tile_b, tile_n)

    # cosine = normalized dot product (inverse norms precomputed in wrapper).
    cosine = raw * xinv_ref[...] * winv_ref[...]

    # sine = sqrt(1 - cos^2); clamp avoids NaN from fp rounding (torch would
    # NaN in that case; elsewhere identical).
    sine = jnp.sqrt(jnp.maximum(1.0 - cosine * cosine, 0.0))

    # ArcFace margin with the scale s folded into both branches.
    cos_s = cosine * s
    phi_s = cosine * (s * cos_m) - sine * (s * sin_m)
    if easy_margin:
        phi_s = jnp.where(cosine > 0, phi_s, cos_s)
    else:
        phi_s = jnp.where(cosine - th > 0, phi_s, cos_s - s * mm)

    # one_hot.scatter_(1, label, 1)  ==  (global column id == label)
    col_base = pl.program_id(1) * tile_n
    col_ids = col_base + jax.lax.broadcasted_iota(jnp.int32, (1, tile_n), 1)
    one_hot = col_ids == lbl_ref[...]                        # (tile_b, tile_n)

    o_ref[...] = jnp.where(one_hot, phi_s, cos_s).astype(o_ref.dtype)


def arc_margin_product(x, weight, label, *, s=32.0, m=0.5, easy_margin=False,
                       tile_b=None, tile_n=None,
                       matmul_dtype=jnp.float32, out_dtype=jnp.float32):
    B, D = x.shape
    N, D2 = weight.shape
    assert D == D2

    # MXU-friendly tiles: tile_b multiple of 8 (up to 128), tile_n multiple of
    # 128 (up to 512).  Both stay small enough to double-buffer comfortably
    # inside v7x's 64 MiB VMEM.
    if tile_b is None:
        tile_b = 128 if B >= 128 else _round_up(B, 8)
    if tile_n is None:
        tile_n = 512 if N >= 512 else _round_up(N, 128)
    assert tile_b % 8 == 0 and tile_n % 128 == 0

    B_pad = _round_up(B, tile_b)
    N_pad = _round_up(N, tile_n)

    cos_m = math.cos(m)
    sin_m = math.sin(m)
    th = math.cos(math.pi - m)
    mm = math.sin(math.pi - m) * m

    # Precompute inverse L2 norms once (F.normalize eps = 1e-12 semantics).
    x32 = x.astype(jnp.float32)
    w32 = weight.astype(jnp.float32)
    x_inv = 1.0 / jnp.maximum(
        jnp.sqrt(jnp.sum(x32 * x32, axis=1, keepdims=True)), 1e-12)   # (B, 1)
    w_inv = 1.0 / jnp.maximum(
        jnp.sqrt(jnp.sum(w32 * w32, axis=1, keepdims=True)), 1e-12)   # (N, 1)
    w_inv_row = w_inv.reshape(1, N)                                   # (1, N)

    # Pad to the tiled grid; padded rows/cols are sliced off afterwards.
    pad_b = B_pad - B
    pad_n = N_pad - N
    x_p = jnp.pad(x.astype(matmul_dtype), ((0, pad_b), (0, 0)))
    w_p = jnp.pad(weight.astype(matmul_dtype), ((0, pad_n), (0, 0)))
    xinv_p = jnp.pad(x_inv, ((0, pad_b), (0, 0)), constant_values=1.0)
    winv_p = jnp.pad(w_inv_row, ((0, 0), (0, pad_n)), constant_values=1.0)
    lbl_p = jnp.pad(label.astype(jnp.int32).reshape(B, 1), ((0, pad_b), (0, 0)))

    kernel = functools.partial(
        _arcface_kernel,
        s=s, cos_m=cos_m, sin_m=sin_m, th=th, mm=mm, easy_margin=easy_margin)

    grid = (B_pad // tile_b, N_pad // tile_n)

    out = pl.pallas_call(
        kernel,
        out_shape=jax.ShapeDtypeStruct((B_pad, N_pad), out_dtype),
        grid_spec=pltpu.PrefetchScalarGridSpec(
            num_scalar_prefetch=0,
            grid=grid,
            in_specs=[
                pl.BlockSpec((tile_b, D), lambda i, j: (i, 0)),   # x rows
                pl.BlockSpec((tile_n, D), lambda i, j: (j, 0)),   # W rows
                pl.BlockSpec((tile_b, 1), lambda i, j: (i, 0)),   # 1/||x||
                pl.BlockSpec((1, tile_n), lambda i, j: (0, j)),   # 1/||w||
                pl.BlockSpec((tile_b, 1), lambda i, j: (i, 0)),   # labels
            ],
            out_specs=pl.BlockSpec((tile_b, tile_n), lambda i, j: (i, j)),
        ),
        compiler_params=pltpu.CompilerParams(
            dimension_semantics=("parallel", "parallel")),
    )(x_p, w_p, xinv_p, winv_p, lbl_p)

    return out[:B, :N]


def _reference(x, weight, label, *, s=32.0, m=0.5, easy_margin=False):
    # Pure-JAX reference mirroring the PyTorch forward (sine clamped; torch
    # would NaN where the clamp engages, identical everywhere else).
    xn = x / jnp.maximum(jnp.linalg.norm(x, axis=1, keepdims=True), 1e-12)
    wn = weight / jnp.maximum(jnp.linalg.norm(weight, axis=1, keepdims=True), 1e-12)
    cosine = xn @ wn.T
    sine = jnp.sqrt(jnp.maximum(1.0 - cosine ** 2, 0.0))
    cos_m, sin_m = math.cos(m), math.sin(m)
    th, mm = math.cos(math.pi - m), math.sin(math.pi - m) * m
    phi = cosine * cos_m - sine * sin_m
    if easy_margin:
        phi = jnp.where(cosine > 0, phi, cosine)
    else:
        phi = jnp.where(cosine - th > 0, phi, cosine - mm)
    one_hot = jax.nn.one_hot(label, cosine.shape[1], dtype=cosine.dtype)
    return (one_hot * phi + (1.0 - one_hot) * cosine) * s


if __name__ == "__main__":
    # Small shapes consistent with the module (in_feature=128); out_feature
    # chosen non-multiple-of-128 and B non-multiple-of-8 to exercise padding.
    B, in_feature, out_feature = 10, 128, 1000

    key = jax.random.PRNGKey(0)
    kx, kw, kl = jax.random.split(key, 3)

    x = jax.random.normal(kx, (B, in_feature), dtype=jnp.float32)

    # Deterministic xavier_uniform_-style init for weight (out_feature, in_feature).
    limit = math.sqrt(6.0 / (in_feature + out_feature))
    weight = jax.random.uniform(kw, (out_feature, in_feature),
                                dtype=jnp.float32, minval=-limit, maxval=limit)

    label = jax.random.randint(kl, (B,), 0, out_feature, dtype=jnp.int32)

    out = arc_margin_product(x, weight, label, s=32.0, m=0.5, easy_margin=False)
    out = jax.block_until_ready(out)

    ref = _reference(x, weight, label, s=32.0, m=0.5, easy_margin=False)
    assert out.shape == (B, out_feature)
    assert jnp.allclose(out, ref, atol=2e-3, rtol=2e-3), "mismatch vs reference"

    # Also check the easy_margin branch compiles/matches.
    out_em = jax.block_until_ready(
        arc_margin_product(x, weight, label, s=32.0, m=0.5, easy_margin=True))
    ref_em = _reference(x, weight, label, s=32.0, m=0.5, easy_margin=True)
    assert jnp.allclose(out_em, ref_em, atol=2e-3, rtol=2e-3), "easy_margin mismatch"

    print("KERNEL_OK")
</pallas_src>

<mosaic_0001>
module attributes {stable_mosaic.version = 11 : i64} {
  func.func @_arcface_kernel(%arg0: i32, %arg1: i32, %arg2: memref<16x128xf32, #tpu.memory_space<vmem>>, %arg3: memref<512x128xf32, #tpu.memory_space<vmem>>, %arg4: memref<16x1xf32, #tpu.memory_space<vmem>>, %arg5: memref<1x512xf32, #tpu.memory_space<vmem>>, %arg6: memref<16x1xi32, #tpu.memory_space<vmem>>, %arg7: memref<16x512xf32, #tpu.memory_space<vmem>>) attributes {dimension_semantics = [#tpu.dimension_semantics<parallel>, #tpu.dimension_semantics<parallel>], iteration_bounds = array<i64: 1, 2>, scalar_prefetch = 0 : i64, scratch_operands = 0 : i64, tpu.core_type = #tpu.core_type<tc>, window_params = [{transform_indices = @transform_0, window_bounds = array<i64: 16, 128>}, {transform_indices = @transform_1, window_bounds = array<i64: 512, 128>}, {transform_indices = @transform_2, window_bounds = array<i64: 16, 1>}, {transform_indices = @transform_3, window_bounds = array<i64: 1, 512>}, {transform_indices = @transform_4, window_bounds = array<i64: 16, 1>}, {transform_indices = @transform_5, window_bounds = array<i64: 16, 512>}]} {
    %c0 = arith.constant 0 : index
    %c0_0 = arith.constant 0 : index
    %0 = vector.load %arg2[%c0, %c0_0] : memref<16x128xf32, #tpu.memory_space<vmem>>, vector<16x128xf32>
    %c0_1 = arith.constant 0 : index
    %c0_2 = arith.constant 0 : index
    %1 = vector.load %arg3[%c0_1, %c0_2] : memref<512x128xf32, #tpu.memory_space<vmem>>, vector<512x128xf32>
    %cst = arith.constant dense<0.000000e+00> : vector<16x512xf32>
    %2 = tpu.matmul %0, %1, %cst {dimension_numbers = #tpu.dot_dimension_numbers<[1], [1], [0], [0], [0, 0, 1, 0], [], []>} : vector<16x128xf32>, vector<512x128xf32>, vector<16x512xf32> -> vector<16x512xf32>
    %c0_3 = arith.constant 0 : index
    %c0_4 = arith.constant 0 : index
    %3 = vector.load %arg4[%c0_3, %c0_4] : memref<16x1xf32, #tpu.memory_space<vmem>>, vector<16x1xf32>
    %4 = vector.broadcast %3 : vector<16x1xf32> to vector<16x512xf32>
    %5 = arith.mulf %2, %4 : vector<16x512xf32>
    %c0_5 = arith.constant 0 : index
    %c0_6 = arith.constant 0 : index
    %6 = vector.load %arg5[%c0_5, %c0_6] : memref<1x512xf32, #tpu.memory_space<vmem>>, vector<1x512xf32>
    %7 = vector.broadcast %6 : vector<1x512xf32> to vector<16x512xf32>
    %8 = arith.mulf %5, %7 : vector<16x512xf32>
    %9 = arith.mulf %8, %8 : vector<16x512xf32>
    %cst_7 = arith.constant 1.000000e+00 : f32
    %10 = vector.broadcast %cst_7 : f32 to vector<16x512xf32>
    %11 = arith.subf %10, %9 : vector<16x512xf32>
    %cst_8 = arith.constant 0.000000e+00 : f32
    %12 = vector.broadcast %cst_8 : f32 to vector<16x512xf32>
    %13 = arith.maximumf %11, %12 : vector<16x512xf32>
    %14 = math.sqrt %13 : vector<16x512xf32>
    %cst_9 = arith.constant 3.200000e+01 : f32
    %15 = vector.broadcast %cst_9 : f32 to vector<16x512xf32>
    %16 = arith.mulf %8, %15 : vector<16x512xf32>
    %cst_10 = arith.constant 28.0826416 : f32
    %17 = vector.broadcast %cst_10 : f32 to vector<16x512xf32>
    %18 = arith.mulf %8, %17 : vector<16x512xf32>
    %cst_11 = arith.constant 15.3416176 : f32
    %19 = vector.broadcast %cst_11 : f32 to vector<16x512xf32>
    %20 = arith.mulf %14, %19 : vector<16x512xf32>
    %21 = arith.subf %18, %20 : vector<16x512xf32>
    %cst_12 = arith.constant -0.87758255 : f32
    %22 = vector.broadcast %cst_12 : f32 to vector<16x512xf32>
    %23 = arith.subf %8, %22 : vector<16x512xf32>
    %cst_13 = arith.constant 0.000000e+00 : f32
    %24 = vector.broadcast %cst_13 : f32 to vector<16x512xf32>
    %25 = arith.cmpf ogt, %23, %24 : vector<16x512xf32>
    %cst_14 = arith.constant 7.67080879 : f32
    %26 = vector.broadcast %cst_14 : f32 to vector<16x512xf32>
    %27 = arith.subf %16, %26 : vector<16x512xf32>
    %28 = arith.select %25, %21, %27 : vector<16x512xi1>, vector<16x512xf32>
    %c512_i32 = arith.constant 512 : i32
    %29 = arith.muli %arg1, %c512_i32 : i32
    %30 = tpu.iota {dimensions = array<i32: 1>} : vector<1x512xi32>
    %31 = vector.broadcast %29 : i32 to vector<1x512xi32>
    %32 = arith.addi %31, %30 : vector<1x512xi32>
    %c0_15 = arith.constant 0 : index
    %c0_16 = arith.constant 0 : index
    %33 = vector.load %arg6[%c0_15, %c0_16] : memref<16x1xi32, #tpu.memory_space<vmem>>, vector<16x1xi32>
    %34 = vector.broadcast %32 : vector<1x512xi32> to vector<16x512xi32>
    %35 = vector.broadcast %33 : vector<16x1xi32> to vector<16x512xi32>
    %36 = arith.cmpi eq, %34, %35 : vector<16x512xi32>
    %37 = arith.select %36, %28, %16 : vector<16x512xi1>, vector<16x512xf32>
    %c0_17 = arith.constant 0 : index
    %c0_18 = arith.constant 0 : index
    %38 = vector.load %arg7[%c0_17, %c0_18] : memref<16x512xf32, #tpu.memory_space<vmem>>, vector<16x512xf32>
    tpu.vector_store %arg7[%c0_17, %c0_18], %37 {strides = array<i32>} : memref<16x512xf32, #tpu.memory_space<vmem>>, vector<16x512xf32>,
    return
  }
  func.func @transform_0(%arg0: i32, %arg1: i32) -> (i32, i32) {
    %c0_i32 = arith.constant 0 : i32
    %c0_i32_0 = arith.constant 0 : i32
    return %arg0, %c0_i32 : i32, i32
  }
  func.func @transform_1(%arg0: i32, %arg1: i32) -> (i32, i32) {
    %c0_i32 = arith.constant 0 : i32
    %c0_i32_0 = arith.constant 0 : i32
    return %arg1, %c0_i32 : i32, i32
  }
  func.func @transform_2(%arg0: i32, %arg1: i32) -> (i32, i32) {
    %c0_i32 = arith.constant 0 : i32
    %c0_i32_0 = arith.constant 0 : i32
    return %arg0, %c0_i32 : i32, i32
  }
  func.func @transform_3(%arg0: i32, %arg1: i32) -> (i32, i32) {
    %c0_i32 = arith.constant 0 : i32
    %c0_i32_0 = arith.constant 0 : i32
    return %c0_i32, %arg1 : i32, i32
  }
  func.func @transform_4(%arg0: i32, %arg1: i32) -> (i32, i32) {
    %c0_i32 = arith.constant 0 : i32
    %c0_i32_0 = arith.constant 0 : i32
    return %arg0, %c0_i32 : i32, i32
  }
  func.func @transform_5(%arg0: i32, %arg1: i32) -> (i32, i32) {
    %c0_i32 = arith.constant 0 : i32
    return %arg0, %arg1 : i32, i32
  }
}

</mosaic_0001>

<llo_original>
// kernel: tpu_custom_call.1
$region0: #{tpu_custom_call.1}
  #allocation0 [shape = 'u32[]', space=smem, size = 0x4, offset = 0x4, fixed_abs, tag = 'smem constant byte address 0x4 - core index']
  #allocation1 [shape = 'u32[144,128]{1,0:T(1,128)}', space=vmem, size = 0x12000, scoped, tag = 'internal scratch']
  %s0 = inlined_call_operand.vmem [shape: f32[16,128], index: 0, kind: input, shape index: {}]
  %s1 = inlined_call_operand.hbm [shape: f32[1024,128], index: 1, kind: input, shape index: {}]
  %s2 = inlined_call_operand.vmem [shape: f32[16,1], index: 2, kind: input, shape index: {}]
  %s3 = inlined_call_operand.vmem [shape: f32[1,1024], index: 3, kind: input, shape index: {}]
  %s4 = inlined_call_operand.vmem [shape: s32[16,1], index: 4, kind: input, shape index: {}]
  %s5 = inlined_call_operand.hbm [shape: f32[16,1024], index: 5, kind: output, shape index: {}]
  %s6 = sld [smem:[#allocation0]]
  $region57: #{tpu_custom_call.1} parent=0
    _
  %s8 = ssub.s32 1, %s6
  %s9 = scalar_select 0, %s8, %s6
  $region1: #{tpu_custom_call.1} parent=0
    #allocation2 [shape = 'u8[524288]{0}', space=vmem, size = 0x80000, scoped, tag = 'input window, operand 1']
    #allocation3 [shape = 's32[2]{0}', space=sflag, size = 0x8, scoped, tag = 'scoped memory for tpu_custom_call.1']
    #allocation4 [shape = 's32[2]{0}', space=sflag, size = 0x8, scoped, tag = 'scoped memory for tpu_custom_call.1']
    #allocation5 [shape = 'u8[65536]{0}', space=vmem, size = 0x10000, scoped, tag = 'output window, operand 0']
    %10 = vsyncpa [#allocation3], 0
    %s11 = scalar_lea.sflag [#allocation3], 1
    %12 = vsyncpa %s11, 0
    %13 = vsyncpa [#allocation4], 0
    %s14 = scalar_lea.sflag [#allocation4], 1
    %15 = vsyncpa %s14, 0
    loop: start=0, step=1, limit=4
    $region2: #{tpu_custom_call.1} parent=1 // loop_pre_header
      _
    $region3: #{tpu_custom_call.1} parent=1 // loop_header
      %s17 = sphi 0, %s21
      %p18 = scmp.ge.s32.totalorder %s17, 4
      %s24 = sphi 0, %s36
      %s25 = sphi 0, %s32
      %s26 = sphi 0, %s24
      %s27 = sphi 0, %s25
      %s28 = sphi 0, %s26
      %s29 = sphi 0, %s27
      %s39 = sphi 0, %s41
      %s42 = sphi 0, %s39
      %s43 = sphi 0, %s42
      %s59 = sphi 0, %s43
      %s65 = sphi 0, %s67
      %s68 = sphi 0, %s65
      %s69 = sphi 0, %s68
      %s85 = sphi 0, %s69
      %s91 = sphi 0, %s93
      %s94 = sphi 0, %s91
      %s95 = sphi 0, %s94
      %s111 = sphi 0, %s95
      %s117 = sphi 0, %s119
      %s120 = sphi 0, %s117
      %s121 = sphi 0, %s120
      %s137 = sphi 0, %s121
      %s143 = sphi 0, %s145
      %s146 = sphi 0, %s143
      %s147 = sphi 0, %s146
      %s163 = sphi 0, %s147
      %s171 = sphi 0, %s173
      %s174 = sphi 0, %s171
      %s175 = sphi 0, %s174
      %s191 = sphi 0, %s175
    $region4: #{tpu_custom_call.1} parent=1 // loop_header_branch
      %20 = sbr.rel (%p18) target = $region8
    $region5: #{tpu_custom_call.1} parent=1 // loop_body
      %s22 = ssub.s32 %s17, 1
      %s23 = ssub.s32 %s17, 2
      %s30 = sadd.s32 1, %s25
      %p31 = scmp.ge.s32.totalorder %s30, 2
      %s32 = scalar_select %p31, 0, %s30
      %s33 = sadd.s32 1, %s24
      %s34 = scalar_select %p31, %s33, %s24
      %p35 = scmp.ge.s32.totalorder %s34, 1
      %s36 = scalar_select %p35, 0, %s34
      %s37 = ssub.s32 %s24, %s36
      %p38 = scmp.eq.s32.totalorder %s37, 0
      %s40 = sadd.s32 %s39, 1
      %s41 = scalar_select %p38, %s39, %s40
      %p44 = pneg %p38
      %p45 = scmp.eq.s32.totalorder %s17, 1
      %p46 = por %p44, %p45
      %p47 = scmp.ne.s32.totalorder %s39, %s42
      %p48 = scmp.eq.s32.totalorder %s17, 0
      %p49 = por %p47, %p48
      %p50 = scmp.ne.s32.totalorder %s39, %s42
      %p51 = scmp.eq.s32.totalorder %s22, 1
      %p52 = por %p50, %p51
      %p53 = scmp.ne.s32.totalorder %s42, %s43
      %p54 = scmp.eq.s32.totalorder %s22, 0
      %p55 = por %p53, %p54
      %p56 = scmp.ne.s32.totalorder %s42, %s43
      %p57 = scmp.eq.s32.totalorder %s23, 1
      %p58 = por %p56, %p57
      %p60 = scmp.ne.s32.totalorder %s43, %s59
      %p61 = scmp.eq.s32.totalorder %s23, 0
      %p62 = por %p60, %p61
      %s63 = ssub.s32 %s25, %s32
      %p64 = scmp.eq.s32.totalorder %s63, 0
      %s66 = sadd.s32 %s65, 1
      %s67 = scalar_select %p64, %s65, %s66
      %p70 = pneg %p64
      %p71 = scmp.eq.s32.totalorder %s17, 1
      %p72 = por %p70, %p71
      %p73 = scmp.ne.s32.totalorder %s65, %s68
      %p74 = scmp.eq.s32.totalorder %s17, 0
      %p75 = por %p73, %p74
      %p76 = scmp.ne.s32.totalorder %s65, %s68
      %p77 = scmp.eq.s32.totalorder %s22, 1
      %p78 = por %p76, %p77
      %p79 = scmp.ne.s32.totalorder %s68, %s69
      %p80 = scmp.eq.s32.totalorder %s22, 0
      %p81 = por %p79, %p80
      %p82 = scmp.ne.s32.totalorder %s68, %s69
      %p83 = scmp.eq.s32.totalorder %s23, 1
      %p84 = por %p82, %p83
      %p86 = scmp.ne.s32.totalorder %s69, %s85
      %p87 = scmp.eq.s32.totalorder %s23, 0
      %p88 = por %p86, %p87
      %s89 = ssub.s32 %s24, %s36
      %p90 = scmp.eq.s32.totalorder %s89, 0
      %s92 = sadd.s32 %s91, 1
      %s93 = scalar_select %p90, %s91, %s92
      %p96 = pneg %p90
      %p97 = scmp.eq.s32.totalorder %s17, 1
      %p98 = por %p96, %p97
      %p99 = scmp.ne.s32.totalorder %s91, %s94
      %p100 = scmp.eq.s32.totalorder %s17, 0
      %p101 = por %p99, %p100
      %p102 = scmp.ne.s32.totalorder %s91, %s94
      %p103 = scmp.eq.s32.totalorder %s22, 1
      %p104 = por %p102, %p103
      %p105 = scmp.ne.s32.totalorder %s94, %s95
      %p106 = scmp.eq.s32.totalorder %s22, 0
      %p107 = por %p105, %p106
      %p108 = scmp.ne.s32.totalorder %s94, %s95
      %p109 = scmp.eq.s32.totalorder %s23, 1
      %p110 = por %p108, %p109
      %p112 = scmp.ne.s32.totalorder %s95, %s111
      %p113 = scmp.eq.s32.totalorder %s23, 0
      %p114 = por %p112, %p113
      %s115 = ssub.s32 %s25, %s32
      %p116 = scmp.eq.s32.totalorder %s115, 0
      %s118 = sadd.s32 %s117, 1
      %s119 = scalar_select %p116, %s117, %s118
      %p122 = pneg %p116
      %p123 = scmp.eq.s32.totalorder %s17, 1
      %p124 = por %p122, %p123
      %p125 = scmp.ne.s32.totalorder %s117, %s120
      %p126 = scmp.eq.s32.totalorder %s17, 0
      %p127 = por %p125, %p126
      %p128 = scmp.ne.s32.totalorder %s117, %s120
      %p129 = scmp.eq.s32.totalorder %s22, 1
      %p130 = por %p128, %p129
      %p131 = scmp.ne.s32.totalorder %s120, %s121
      %p132 = scmp.eq.s32.totalorder %s22, 0
      %p133 = por %p131, %p132
      %p134 = scmp.ne.s32.totalorder %s120, %s121
      %p135 = scmp.eq.s32.totalorder %s23, 1
      %p136 = por %p134, %p135
      %p138 = scmp.ne.s32.totalorder %s121, %s137
      %p139 = scmp.eq.s32.totalorder %s23, 0
      %p140 = por %p138, %p139
      %s141 = ssub.s32 %s24, %s36
      %p142 = scmp.eq.s32.totalorder %s141, 0
      %s144 = sadd.s32 %s143, 1
      %s145 = scalar_select %p142, %s143, %s144
      %p148 = pneg %p142
      %p149 = scmp.eq.s32.totalorder %s17, 1
      %p150 = por %p148, %p149
      %p151 = scmp.ne.s32.totalorder %s143, %s146
      %p152 = scmp.eq.s32.totalorder %s17, 0
      %p153 = por %p151, %p152
      %p154 = scmp.ne.s32.totalorder %s143, %s146
      %p155 = scmp.eq.s32.totalorder %s22, 1
      %p156 = por %p154, %p155
      %p157 = scmp.ne.s32.totalorder %s146, %s147
      %p158 = scmp.eq.s32.totalorder %s22, 0
      %p159 = por %p157, %p158
      %p160 = scmp.ne.s32.totalorder %s146, %s147
      %p161 = scmp.eq.s32.totalorder %s23, 1
      %p162 = por %p160, %p161
      %p164 = scmp.ne.s32.totalorder %s147, %s163
      %p165 = scmp.eq.s32.totalorder %s23, 0
      %p166 = por %p164, %p165
      %s167 = ssub.s32 %s24, %s36
      %s168 = ssub.s32 %s25, %s32
      %s169 = sor.u32 %s167, %s168
      %p170 = scmp.eq.s32.totalorder %s169, 0
      %s172 = sadd.s32 %s171, 1
      %s173 = scalar_select %p170, %s171, %s172
      %p176 = pneg %p170
      %p177 = scmp.eq.s32.totalorder %s17, 1
      %p178 = por %p176, %p177
      %p179 = scmp.ne.s32.totalorder %s171, %s174
      %p180 = scmp.eq.s32.totalorder %s17, 0
      %p181 = por %p179, %p180
      %p182 = scmp.ne.s32.totalorder %s171, %s174
      %p183 = scmp.eq.s32.totalorder %s22, 1
      %p184 = por %p182, %p183
      %p185 = scmp.ne.s32.totalorder %s174, %s175
      %p186 = scmp.eq.s32.totalorder %s22, 0
      %p187 = por %p185, %p186
      %p188 = scmp.ne.s32.totalorder %s174, %s175
      %p189 = scmp.eq.s32.totalorder %s23, 1
      %p190 = por %p188, %p189
      %p192 = scmp.ne.s32.totalorder %s175, %s191
      %p193 = scmp.eq.s32.totalorder %s23, 0
      %p194 = por %p192, %p193
      %p195 = scmp.le.s32.totalorder 1, %s17
      %p196 = scmp.lt.s32.totalorder %s17, 3
      %p197 = pnand %p195, %p196
      %p198 = pneg %p197
      // Predicated region
      $region9: #{tpu_custom_call.1} parent=5 // pred_check
        _
      $region10: #{tpu_custom_call.1} parent=5 // pred_check_branch
        %200 = sbr.rel (%p197) target = $region12
      $region11: #{tpu_custom_call.1} parent=5 // pred_region
        %s201 = ssub.s32 %s17, 1
        // Predicated region
        $region13: #{tpu_custom_call.1} parent=11 // pred_check
          %p202 = pneg %p55
        $region14: #{tpu_custom_call.1} parent=11 // pred_check_branch
          %204 = sbr.rel (%p202) target = $region16
        $region15: #{tpu_custom_call.1} parent=11 // pred_region
          %s205 = smul.u32 2, %s26
          %p206 = scmp.lt.s32.totalorder %s205, 1
          %s207 = scalar_select %p206, %s205, 1
          %s208 = smul.addr %s207, 8
          %s209 = scalar_lea.vmem %s0, %s208
          %s210 = smul.u32 2, %s26
        $region16: #{tpu_custom_call.1} parent=11 // pred_fallthru
          _
        // Predicated region
        $region17: #{tpu_custom_call.1} parent=11 // pred_check
          %p211 = pneg %p107
        $region18: #{tpu_custom_call.1} parent=11 // pred_check_branch
          %213 = sbr.rel (%p211) target = $region20
        $region19: #{tpu_custom_call.1} parent=11 // pred_region
          %s214 = smul.u32 2, %s26
          %p215 = scmp.lt.s32.totalorder %s214, 1
          %s216 = scalar_select %p215, %s214, 1
          %s217 = smul.addr %s216, 8
          %s218 = scalar_lea.vmem %s2, %s217
          %s219 = smul.u32 2, %s26
        $region20: #{tpu_custom_call.1} parent=11 // pred_fallthru
          _
        // Predicated region
        $region21: #{tpu_custom_call.1} parent=11 // pred_check
          %p220 = pneg %p159
        $region22: #{tpu_custom_call.1} parent=11 // pred_check_branch
          %222 = sbr.rel (%p220) target = $region24
        $region23: #{tpu_custom_call.1} parent=11 // pred_region
          %s223 = smul.u32 2, %s26
          %p224 = scmp.lt.s32.totalorder %s223, 1
          %s225 = scalar_select %p224, %s223, 1
          %s226 = smul.addr %s225, 8
          %s227 = scalar_lea.vmem %s4, %s226
          %s228 = smul.u32 2, %s26
        $region24: #{tpu_custom_call.1} parent=11 // pred_fallthru
          _
      $region12: #{tpu_custom_call.1} parent=5 // pred_fallthru
        _
      %p229 = scmp.lt.s32.totalorder %s17, 2
      // Predicated region
      $region25: #{tpu_custom_call.1} parent=5 // pred_check
        %p230 = pneg %p229
      $region26: #{tpu_custom_call.1} parent=5 // pred_check_branch
        %232 = sbr.rel (%p230) target = $region28
      $region27: #{tpu_custom_call.1} parent=5 // pred_region
        // Predicated region
        $region29: #{tpu_custom_call.1} parent=27 // pred_check
          %p233 = pneg %p75
        $region30: #{tpu_custom_call.1} parent=27 // pred_check_branch
          %235 = sbr.rel (%p233) target = $region32
        $region31: #{tpu_custom_call.1} parent=27 // pred_region
          %s236 = sand.u32 %s65, 1
          %s237 = scalar_lea.sflag [#allocation3], %s236
          %s238 = sand.u32 %s65, 1
          %s239 = smul.addr %s238, 512
          %s240 = scalar_lea.vmem [#allocation2], %s239
          %s241 = smul.u32 64, %s25
          %s243 = ssub.s32 8192, 8192
          %244 = vsyncadd %s237, %s243
          %s245 = smul.addr %s241, 128
          %s246 = scalar_lea.hbm %s1, %s245
          %s247 = sshll.u32 %s240, 4
          %s248 = int_to_ptr.vmem [resolvable:$true] %s247
          %253 = dma.hbm_to_vmem [thread:$0]  %s246, 8192, %s248, %s237, 128, 128, 8
        $region32: #{tpu_custom_call.1} parent=27 // pred_fallthru
          _
        // Predicated region
        $region33: #{tpu_custom_call.1} parent=27 // pred_check
          %p254 = pneg %p127
        $region34: #{tpu_custom_call.1} parent=27 // pred_check_branch
          %256 = sbr.rel (%p254) target = $region36
        $region35: #{tpu_custom_call.1} parent=27 // pred_region
          %s257 = smul.u32 4, %s25
          %p258 = scmp.lt.s32.totalorder %s257, 7
          %s259 = scalar_select %p258, %s257, 7
          %s260 = scalar_lea.vmem %s3, %s259
          %s261 = smul.u32 4, %s25
        $region36: #{tpu_custom_call.1} parent=27 // pred_fallthru
          _
      $region28: #{tpu_custom_call.1} parent=5 // pred_fallthru
        _
      %p262 = scmp.le.s32.totalorder 1, %s17
      %p263 = scmp.lt.s32.totalorder %s17, 3
      %p264 = pnand %p262, %p263
      %p265 = pneg %p264
      // Predicated region
      $region37: #{tpu_custom_call.1} parent=5 // pred_check
        _
      $region38: #{tpu_custom_call.1} parent=5 // pred_check_branch
        %267 = sbr.rel (%p264) target = $region40
      $region39: #{tpu_custom_call.1} parent=5 // pred_region
        %s268 = ssub.s32 %s17, 1
        %s269 = sand.u32 %s68, 1
        %s270 = scalar_lea.sflag [#allocation3], %s269
        %s271 = sand.u32 %s68, 1
        %s272 = smul.addr %s271, 512
        %s273 = scalar_lea.vmem [#allocation2], %s272
        // Predicated region
        $region41: #{tpu_custom_call.1} parent=39 // pred_check
          %p274 = pneg %p81
        $region42: #{tpu_custom_call.1} parent=39 // pred_check_branch
          %276 = sbr.rel (%p274) target = $region44
        $region43: #{tpu_custom_call.1} parent=39 // pred_region
          %277 = dma.done %s270, 8192
        $region44: #{tpu_custom_call.1} parent=39 // pred_fallthru
          _
        %s278 = smul.u32 2, %s26
        %p279 = scmp.lt.s32.totalorder %s278, 1
        %s280 = scalar_select %p279, %s278, 1
        %s281 = smul.addr %s280, 8
        %s282 = scalar_lea.vmem %s0, %s281
        %p283 = pneg %p55
        %p284 = pneg %p52
        %s285 = sand.u32 %s68, 1
        %s286 = scalar_lea.sflag [#allocation3], %s285
        %s287 = sand.u32 %s68, 1
        %s288 = smul.addr %s287, 512
        %s289 = scalar_lea.vmem [#allocation2], %s288
        %p290 = pneg %p81
        %p291 = pneg %p78
        %s292 = smul.u32 2, %s26
        %p293 = scmp.lt.s32.totalorder %s292, 1
        %s294 = scalar_select %p293, %s292, 1
        %s295 = smul.addr %s294, 8
        %s296 = scalar_lea.vmem %s2, %s295
        %p297 = pneg %p107
        %p298 = pneg %p104
        %s299 = smul.u32 4, %s27
        %p300 = scmp.lt.s32.totalorder %s299, 7
        %s301 = scalar_select %p300, %s299, 7
        %s302 = scalar_lea.vmem %s3, %s301
        %p303 = pneg %p133
        %p304 = pneg %p130
        %s305 = smul.u32 2, %s26
        %p306 = scmp.lt.s32.totalorder %s305, 1
        %s307 = scalar_select %p306, %s305, 1
        %s308 = smul.addr %s307, 8
        %s309 = scalar_lea.vmem %s4, %s308
        %p310 = pneg %p159
        %p311 = pneg %p156
        %p312 = pneg %p187
        %p313 = pneg %p184
        %s314 = sand.u32 %s174, 1
        %s315 = scalar_lea.sflag [#allocation4], %s314
        %s316 = sand.u32 %s174, 1
        %s317 = smul.addr %s316, 64
        %s318 = scalar_lea.vmem [#allocation5], %s317
        %s319 = smul.u32 2, %s26
        %p320 = scmp.lt.s32.totalorder %s319, 1
        %s321 = scalar_select %p320, %s319, 1
        %s322 = smul.addr %s321, 8
        %s323 = scalar_lea.vmem %s0, %s322
        %s324 = smul.u32 2, %s26
        %s325 = smul.u32 64, %s27
        %s326 = smul.u32 2, %s26
        %p327 = scmp.lt.s32.totalorder %s326, 1
        %s328 = scalar_select %p327, %s326, 1
        %s329 = smul.addr %s328, 8
        %s330 = scalar_lea.vmem %s2, %s329
        %s331 = smul.u32 2, %s26
        %s332 = smul.u32 4, %s27
        %p333 = scmp.lt.s32.totalorder %s332, 7
        %s334 = scalar_select %p333, %s332, 7
        %s335 = scalar_lea.vmem %s3, %s334
        %s336 = smul.u32 4, %s27
        %s337 = smul.u32 2, %s26
        %p338 = scmp.lt.s32.totalorder %s337, 1
        %s339 = scalar_select %p338, %s337, 1
        %s340 = smul.addr %s339, 8
        %s341 = scalar_lea.vmem %s4, %s340
        %s342 = smul.u32 2, %s26
        %s343 = smul.u32 2, %s26
        %s344 = smul.u32 4, %s27
        %v345 = vld [vmem:[%s323] sm:$0xff]
        %v346 = vld [vmem:[%s323 + $0x8] sm:$0xff]
        %v347 = vld [vmem:[%s273] sm:$0xff]
        %v348 = vld [vmem:[%s273 + $0x8] sm:$0xff]
        %v349 = vld [vmem:[%s273 + $0x10] sm:$0xff]
        %v350 = vld [vmem:[%s273 + $0x18] sm:$0xff]
        %v351 = vld [vmem:[%s273 + $0x20] sm:$0xff]
        %v352 = vld [vmem:[%s273 + $0x28] sm:$0xff]
        %v353 = vld [vmem:[%s273 + $0x30] sm:$0xff]
        %v354 = vld [vmem:[%s273 + $0x38] sm:$0xff]
        %v355 = vld [vmem:[%s273 + $0x40] sm:$0xff]
        %v356 = vld [vmem:[%s273 + $0x48] sm:$0xff]
        %v357 = vld [vmem:[%s273 + $0x50] sm:$0xff]
        %v358 = vld [vmem:[%s273 + $0x58] sm:$0xff]
        %v359 = vld [vmem:[%s273 + $0x60] sm:$0xff]
        %v360 = vld [vmem:[%s273 + $0x68] sm:$0xff]
        %v361 = vld [vmem:[%s273 + $0x70] sm:$0xff]
        %v362 = vld [vmem:[%s273 + $0x78] sm:$0xff]
        %v363 = vld [vmem:[%s273 + $0x80] sm:$0xff]
        %v364 = vld [vmem:[%s273 + $0x88] sm:$0xff]
        %v365 = vld [vmem:[%s273 + $0x90] sm:$0xff]
        %v366 = vld [vmem:[%s273 + $0x98] sm:$0xff]
        %v367 = vld [vmem:[%s273 + $0xa0] sm:$0xff]
        %v368 = vld [vmem:[%s273 + $0xa8] sm:$0xff]
        %v369 = vld [vmem:[%s273 + $0xb0] sm:$0xff]
        %v370 = vld [vmem:[%s273 + $0xb8] sm:$0xff]
        %v371 = vld [vmem:[%s273 + $0xc0] sm:$0xff]
        %v372 = vld [vmem:[%s273 + $0xc8] sm:$0xff]
        %v373 = vld [vmem:[%s273 + $0xd0] sm:$0xff]
        %v374 = vld [vmem:[%s273 + $0xd8] sm:$0xff]
        %v375 = vld [vmem:[%s273 + $0xe0] sm:$0xff]
        %v376 = vld [vmem:[%s273 + $0xe8] sm:$0xff]
        %v377 = vld [vmem:[%s273 + $0xf0] sm:$0xff]
        %v378 = vld [vmem:[%s273 + $0xf8] sm:$0xff]
        %v379 = vld [vmem:[%s273 + $0x100] sm:$0xff]
        %v380 = vld [vmem:[%s273 + $0x108] sm:$0xff]
        %v381 = vld [vmem:[%s273 + $0x110] sm:$0xff]
        %v382 = vld [vmem:[%s273 + $0x118] sm:$0xff]
        %v383 = vld [vmem:[%s273 + $0x120] sm:$0xff]
        %v384 = vld [vmem:[%s273 + $0x128] sm:$0xff]
        %v385 = vld [vmem:[%s273 + $0x130] sm:$0xff]
        %v386 = vld [vmem:[%s273 + $0x138] sm:$0xff]
        %v387 = vld [vmem:[%s273 + $0x140] sm:$0xff]
        %v388 = vld [vmem:[%s273 + $0x148] sm:$0xff]
        %v389 = vld [vmem:[%s273 + $0x150] sm:$0xff]
        %v390 = vld [vmem:[%s273 + $0x158] sm:$0xff]
        %v391 = vld [vmem:[%s273 + $0x160] sm:$0xff]
        %v392 = vld [vmem:[%s273 + $0x168] sm:$0xff]
        %v393 = vld [vmem:[%s273 + $0x170] sm:$0xff]
        %v394 = vld [vmem:[%s273 + $0x178] sm:$0xff]
        %v395 = vld [vmem:[%s273 + $0x180] sm:$0xff]
        %v396 = vld [vmem:[%s273 + $0x188] sm:$0xff]
        %v397 = vld [vmem:[%s273 + $0x190] sm:$0xff]
        %v398 = vld [vmem:[%s273 + $0x198] sm:$0xff]
        %v399 = vld [vmem:[%s273 + $0x1a0] sm:$0xff]
        %v400 = vld [vmem:[%s273 + $0x1a8] sm:$0xff]
        %v401 = vld [vmem:[%s273 + $0x1b0] sm:$0xff]
        %v402 = vld [vmem:[%s273 + $0x1b8] sm:$0xff]
        %v403 = vld [vmem:[%s273 + $0x1c0] sm:$0xff]
        %v404 = vld [vmem:[%s273 + $0x1c8] sm:$0xff]
        %v405 = vld [vmem:[%s273 + $0x1d0] sm:$0xff]
        %v406 = vld [vmem:[%s273 + $0x1d8] sm:$0xff]
        %v407 = vld [vmem:[%s273 + $0x1e0] sm:$0xff]
        %v408 = vld [vmem:[%s273 + $0x1e8] sm:$0xff]
        %v409 = vld [vmem:[%s273 + $0x1f0] sm:$0xff]
        %v410 = vld [vmem:[%s273 + $0x1f8] sm:$0xff]
        %411 = vmatprep.subr.mxu0 0.0
        %412 = vmatpush1.xpose.msra.mxu0 %v347
        %413 = vmatprep.subr.mxu0 0.0
        %414 = vmatpush1.xpose.msra.mxu0 %v348
        %415 = vmatprep.subr.mxu0 0.0
        %416 = vmatpush1.xpose.msra.mxu0 %v349
        %417 = vmatprep.subr.mxu0 0.0
        %418 = vmatpush1.xpose.msra.mxu0 %v350
        %419 = vmatprep.subr.mxu0 0.0
        %420 = vmatpush1.xpose.msra.mxu0 %v351
        %421 = vmatprep.subr.mxu0 0.0
        %422 = vmatpush1.xpose.msra.mxu0 %v352
        %423 = vmatprep.subr.mxu0 0.0
        %424 = vmatpush1.xpose.msra.mxu0 %v353
        %425 = vmatprep.subr.mxu0 0.0
        %426 = vmatpush1.xpose.msra.mxu0 %v354
        %427 = vmatprep.subr.mxu0 0.0
        %428 = vmatpush1.xpose.msra.mxu0 %v355
        %429 = vmatprep.subr.mxu0 0.0
        %430 = vmatpush1.xpose.msra.mxu0 %v356
        %431 = vmatprep.subr.mxu0 0.0
        %432 = vmatpush1.xpose.msra.mxu0 %v357
        %433 = vmatprep.subr.mxu0 0.0
        %434 = vmatpush1.xpose.msra.mxu0 %v358
        %435 = vmatprep.subr.mxu0 0.0
        %436 = vmatpush1.xpose.msra.mxu0 %v359
        %437 = vmatprep.subr.mxu0 0.0
        %438 = vmatpush1.xpose.msra.mxu0 %v360
        %439 = vmatprep.subr.mxu0 0.0
        %440 = vmatpush1.xpose.msra.mxu0 %v361
        %441 = vmatprep.subr.mxu0 0.0
        %442 = vmatpush1.xpose.msra.mxu0 %v362
        %443 = vmatprep.subr.mxu0 0.0
        %444 = vmatpush1.xpose.msra.mxu0 %v363
        %445 = vmatprep.subr.mxu0 0.0
        %446 = vmatpush1.xpose.msra.mxu0 %v364
        %447 = vmatprep.subr.mxu0 0.0
        %448 = vmatpush1.xpose.msra.mxu0 %v365
        %449 = vmatprep.subr.mxu0 0.0
        %450 = vmatpush1.xpose.msra.mxu0 %v366
        %451 = vmatprep.subr.mxu0 0.0
        %452 = vmatpush1.xpose.msra.mxu0 %v367
        %453 = vmatprep.subr.mxu0 0.0
        %454 = vmatpush1.xpose.msra.mxu0 %v368
        %455 = vmatprep.subr.mxu0 0.0
        %456 = vmatpush1.xpose.msra.mxu0 %v369
        %457 = vmatprep.subr.mxu0 0.0
        %458 = vmatpush1.xpose.msra.mxu0 %v370
        %459 = vmatprep.subr.mxu0 0.0
        %460 = vmatpush1.xpose.msra.mxu0 %v371
        %461 = vmatprep.subr.mxu0 0.0
        %462 = vmatpush1.xpose.msra.mxu0 %v372
        %463 = vmatprep.subr.mxu0 0.0
        %464 = vmatpush1.xpose.msra.mxu0 %v373
        %465 = vmatprep.subr.mxu0 0.0
        %466 = vmatpush1.xpose.msra.mxu0 %v374
        %467 = vmatprep.subr.mxu0 0.0
        %468 = vmatpush1.xpose.msra.mxu0 %v375
        %469 = vmatprep.subr.mxu0 0.0
        %470 = vmatpush1.xpose.msra.mxu0 %v376
        %471 = vmatprep.subr.mxu0 0.0
        %472 = vmatpush1.xpose.msra.mxu0 %v377
        %473 = vmatprep.subr.mxu0 0.0
        %474 = vmatpush1.xpose.msra.mxu0 %v378
        %475 = vmatprep.mubr.f32.mxu0 0.0
        %476 = vmatmul.mubr.f32.gmra.mrb[0].mxu0 %v345
        %v477 = vpop.f32.mrb[0].mxu0
        %v478 = vadd.f32 0.0, %v477
        %v479 = vpop.f32.mrb[0].mxu0
        %v480 = vadd.f32 0.0, %v479
        %481 = vmatprep.mubr.f32.mxu0 0.0
        %482 = vmatmul.mubr.f32.gmra.mrb[0].mxu0 %v346
        %v483 = vpop.f32.mrb[0].mxu0
        %v484 = vadd.f32 0.0, %v483
        %v485 = vpop.f32.mrb[0].mxu0
        %v486 = vadd.f32 0.0, %v485
        %487 = vdwg.mxu0
        %488 = vmatprep.subr.mxu0 0.0
        %489 = vmatpush1.xpose.msra.mxu0 %v379
        %490 = vmatprep.subr.mxu0 0.0
        %491 = vmatpush1.xpose.msra.mxu0 %v380
        %492 = vmatprep.subr.mxu0 0.0
        %493 = vmatpush1.xpose.msra.mxu0 %v381
        %494 = vmatprep.subr.mxu0 0.0
        %495 = vmatpush1.xpose.msra.mxu0 %v382
        %496 = vmatprep.subr.mxu0 0.0
        %497 = vmatpush1.xpose.msra.mxu0 %v383
        %498 = vmatprep.subr.mxu0 0.0
        %499 = vmatpush1.xpose.msra.mxu0 %v384
        %500 = vmatprep.subr.mxu0 0.0
        %501 = vmatpush1.xpose.msra.mxu0 %v385
        %502 = vmatprep.subr.mxu0 0.0
        %503 = vmatpush1.xpose.msra.mxu0 %v386
        %504 = vmatprep.subr.mxu0 0.0
        %505 = vmatpush1.xpose.msra.mxu0 %v387
        %506 = vmatprep.subr.mxu0 0.0
        %507 = vmatpush1.xpose.msra.mxu0 %v388
        %508 = vmatprep.subr.mxu0 0.0
        %509 = vmatpush1.xpose.msra.mxu0 %v389
        %510 = vmatprep.subr.mxu0 0.0
        %511 = vmatpush1.xpose.msra.mxu0 %v390
        %512 = vmatprep.subr.mxu0 0.0
        %513 = vmatpush1.xpose.msra.mxu0 %v391
        %514 = vmatprep.subr.mxu0 0.0
        %515 = vmatpush1.xpose.msra.mxu0 %v392
        %516 = vmatprep.subr.mxu0 0.0
        %517 = vmatpush1.xpose.msra.mxu0 %v393
        %518 = vmatprep.subr.mxu0 0.0
        %519 = vmatpush1.xpose.msra.mxu0 %v394
        %520 = vmatprep.subr.mxu0 0.0
        %521 = vmatpush1.xpose.msra.mxu0 %v395
        %522 = vmatprep.subr.mxu0 0.0
        %523 = vmatpush1.xpose.msra.mxu0 %v396
        %524 = vmatprep.subr.mxu0 0.0
        %525 = vmatpush1.xpose.msra.mxu0 %v397
        %526 = vmatprep.subr.mxu0 0.0
        %527 = vmatpush1.xpose.msra.mxu0 %v398
        %528 = vmatprep.subr.mxu0 0.0
        %529 = vmatpush1.xpose.msra.mxu0 %v399
        %530 = vmatprep.subr.mxu0 0.0
        %531 = vmatpush1.xpose.msra.mxu0 %v400
        %532 = vmatprep.subr.mxu0 0.0
        %533 = vmatpush1.xpose.msra.mxu0 %v401
        %534 = vmatprep.subr.mxu0 0.0
        %535 = vmatpush1.xpose.msra.mxu0 %v402
        %536 = vmatprep.subr.mxu0 0.0
        %537 = vmatpush1.xpose.msra.mxu0 %v403
        %538 = vmatprep.subr.mxu0 0.0
        %539 = vmatpush1.xpose.msra.mxu0 %v404
        %540 = vmatprep.subr.mxu0 0.0
        %541 = vmatpush1.xpose.msra.mxu0 %v405
        %542 = vmatprep.subr.mxu0 0.0
        %543 = vmatpush1.xpose.msra.mxu0 %v406
        %544 = vmatprep.subr.mxu0 0.0
        %545 = vmatpush1.xpose.msra.mxu0 %v407
        %546 = vmatprep.subr.mxu0 0.0
        %547 = vmatpush1.xpose.msra.mxu0 %v408
        %548 = vmatprep.subr.mxu0 0.0
        %549 = vmatpush1.xpose.msra.mxu0 %v409
        %550 = vmatprep.subr.mxu0 0.0
        %551 = vmatpush1.xpose.msra.mxu0 %v410
        %552 = vmatprep.mubr.f32.mxu0 0.0
        %553 = vmatmul.mubr.f32.gmra.mrb[0].mxu0 %v345
        %v554 = vpop.f32.mrb[0].mxu0
        %v555 = vadd.f32 0.0, %v554
        %v556 = vpop.f32.mrb[0].mxu0
        %v557 = vadd.f32 0.0, %v556
        %558 = vmatprep.mubr.f32.mxu0 0.0
        %559 = vmatmul.mubr.f32.gmra.mrb[0].mxu0 %v346
        %v560 = vpop.f32.mrb[0].mxu0
        %v561 = vadd.f32 0.0, %v560
        %v562 = vpop.f32.mrb[0].mxu0
        %v563 = vadd.f32 0.0, %v562
        %564 = vdwg.mxu0
        %v565 = vld [vmem:[%s330] sm:$0xff]
        %v566 = vld [vmem:[%s330 + $0x8] sm:$0xff]
        %568 = vset.pattern.permute.xlu0 0
        %569 = vperm.xlu0 %568, %v565
        %v570 = vpop.permute.xlu0 %569
        %573 = vset.pattern.permute.xlu0 0
        %574 = vperm.xlu0 %573, %v566
        %v575 = vpop.permute.xlu0 %574
        %v577 = vmul.f32 %v478, %v570
        %v578 = vmul.f32 %v480, %v570
        %v579 = vmul.f32 %v555, %v570
        %v580 = vmul.f32 %v557, %v570
        %v581 = vmul.f32 %v484, %v575
        %v582 = vmul.f32 %v486, %v575
        %v583 = vmul.f32 %v561, %v575
        %v584 = vmul.f32 %v563, %v575
        %v585 = vld [vmem:[%s335] sm:$0xf]
        %v587 = vlaneseq
        %v588 = vshrl.u32 %v587, 7
        %v589 = vsub.s32 0, %v588
        %v590 = vrot.slane %v585, %v589
        %v591 = vlaneseq
        %v592 = vshrl.u32 %v591, 7
        %v593 = vsub.s32 1, %v592
        %v594 = vrot.slane %v585, %v593
        %v595 = vlaneseq
        %v596 = vshrl.u32 %v595, 7
        %v597 = vsub.s32 2, %v596
        %v598 = vrot.slane %v585, %v597
        %v599 = vlaneseq
        %v600 = vshrl.u32 %v599, 7
        %v601 = vsub.s32 3, %v600
        %v602 = vrot.slane %v585, %v601
        %v607 = vmul.f32 %v577, %v590
        %v608 = vmul.f32 %v578, %v594
        %v609 = vmul.f32 %v579, %v598
        %v610 = vmul.f32 %v580, %v602
        %v611 = vmul.f32 %v581, %v590
        %v612 = vmul.f32 %v582, %v594
        %v613 = vmul.f32 %v583, %v598
        %v614 = vmul.f32 %v584, %v602
        %v615 = vmul.f32 %v607, %v607
        %v616 = vmul.f32 %v608, %v608
        %v617 = vmul.f32 %v609, %v609
        %v618 = vmul.f32 %v610, %v610
        %v619 = vmul.f32 %v611, %v611
        %v620 = vmul.f32 %v612, %v612
        %v621 = vmul.f32 %v613, %v613
        %v622 = vmul.f32 %v614, %v614
        %v623 = vsub.f32 1.0, %v615
        %v624 = vsub.f32 1.0, %v616
        %v625 = vsub.f32 1.0, %v617
        %v626 = vsub.f32 1.0, %v618
        %v627 = vsub.f32 1.0, %v619
        %v628 = vsub.f32 1.0, %v620
        %v629 = vsub.f32 1.0, %v621
        %v630 = vsub.f32 1.0, %v622
        %v631 = vmax.f32 %v623, 0.0
        %v632 = vmax.f32 %v624, 0.0
        %v633 = vmax.f32 %v625, 0.0
        %v634 = vmax.f32 %v626, 0.0
        %v635 = vmax.f32 %v627, 0.0
        %v636 = vmax.f32 %v628, 0.0
        %v637 = vmax.f32 %v629, 0.0
        %v638 = vmax.f32 %v630, 0.0
        %v639 = vrsqrt.pop %v631
        %v640 = vmul.f32 %v631, %v639
        %vm641 = vcmp.eq.f32.partialorder %v631, inf
        %v642 = vsel %vm641, %v631, %v640
        %vm643 = vcmp.eq.f32.partialorder %v631, 0.0
        %v644 = vand.u32 %v631, 2147483648
        %v645 = vsel %vm643, %v644, %v642
        %v646 = vrsqrt.pop %v632
        %v647 = vmul.f32 %v632, %v646
        %vm648 = vcmp.eq.f32.partialorder %v632, inf
        %v649 = vsel %vm648, %v632, %v647
        %vm650 = vcmp.eq.f32.partialorder %v632, 0.0
        %v651 = vand.u32 %v632, 2147483648
        %v652 = vsel %vm650, %v651, %v649
        %v653 = vrsqrt.pop %v633
        %v654 = vmul.f32 %v633, %v653
        %vm655 = vcmp.eq.f32.partialorder %v633, inf
        %v656 = vsel %vm655, %v633, %v654
        %vm657 = vcmp.eq.f32.partialorder %v633, 0.0
        %v658 = vand.u32 %v633, 2147483648
        %v659 = vsel %vm657, %v658, %v656
        %v660 = vrsqrt.pop %v634
        %v661 = vmul.f32 %v634, %v660
        %vm662 = vcmp.eq.f32.partialorder %v634, inf
        %v663 = vsel %vm662, %v634, %v661
        %vm664 = vcmp.eq.f32.partialorder %v634, 0.0
        %v665 = vand.u32 %v634, 2147483648
        %v666 = vsel %vm664, %v665, %v663
        %v667 = vrsqrt.pop %v635
        %v668 = vmul.f32 %v635, %v667
        %vm669 = vcmp.eq.f32.partialorder %v635, inf
        %v670 = vsel %vm669, %v635, %v668
        %vm671 = vcmp.eq.f32.partialorder %v635, 0.0
        %v672 = vand.u32 %v635, 2147483648
        %v673 = vsel %vm671, %v672, %v670
        %v674 = vrsqrt.pop %v636
        %v675 = vmul.f32 %v636, %v674
        %vm676 = vcmp.eq.f32.partialorder %v636, inf
        %v677 = vsel %vm676, %v636, %v675
        %vm678 = vcmp.eq.f32.partialorder %v636, 0.0
        %v679 = vand.u32 %v636, 2147483648
        %v680 = vsel %vm678, %v679, %v677
        %v681 = vrsqrt.pop %v637
        %v682 = vmul.f32 %v637, %v681
        %vm683 = vcmp.eq.f32.partialorder %v637, inf
        %v684 = vsel %vm683, %v637, %v682
        %vm685 = vcmp.eq.f32.partialorder %v637, 0.0
        %v686 = vand.u32 %v637, 2147483648
        %v687 = vsel %vm685, %v686, %v684
        %v688 = vrsqrt.pop %v638
        %v689 = vmul.f32 %v638, %v688
        %vm690 = vcmp.eq.f32.partialorder %v638, inf
        %v691 = vsel %vm690, %v638, %v689
        %vm692 = vcmp.eq.f32.partialorder %v638, 0.0
        %v693 = vand.u32 %v638, 2147483648
        %v694 = vsel %vm692, %v693, %v691
        %v695 = vmul.f32 %v607, 32.0
        %v696 = vmul.f32 %v608, 32.0
        %v697 = vmul.f32 %v609, 32.0
        %v698 = vmul.f32 %v610, 32.0
        %v699 = vmul.f32 %v611, 32.0
        %v700 = vmul.f32 %v612, 32.0
        %v701 = vmul.f32 %v613, 32.0
        %v702 = vmul.f32 %v614, 32.0
        %v703 = vmul.f32 %v607, 28.082642
        %v704 = vmul.f32 %v608, 28.082642
        %v705 = vmul.f32 %v609, 28.082642
        %v706 = vmul.f32 %v610, 28.082642
        %v707 = vmul.f32 %v611, 28.082642
        %v708 = vmul.f32 %v612, 28.082642
        %v709 = vmul.f32 %v613, 28.082642
        %v710 = vmul.f32 %v614, 28.082642
        %v711 = vmul.f32 %v645, 15.341618
        %v712 = vmul.f32 %v652, 15.341618
        %v713 = vmul.f32 %v659, 15.341618
        %v714 = vmul.f32 %v666, 15.341618
        %v715 = vmul.f32 %v673, 15.341618
        %v716 = vmul.f32 %v680, 15.341618
        %v717 = vmul.f32 %v687, 15.341618
        %v718 = vmul.f32 %v694, 15.341618
        %v719 = vsub.f32 %v703, %v711
        %v720 = vsub.f32 %v704, %v712
        %v721 = vsub.f32 %v705, %v713
        %v722 = vsub.f32 %v706, %v714
        %v723 = vsub.f32 %v707, %v715
        %v724 = vsub.f32 %v708, %v716
        %v725 = vsub.f32 %v709, %v717
        %v726 = vsub.f32 %v710, %v718
        %v727 = vsub.f32 %v607, -0.87758255
        %v728 = vsub.f32 %v608, -0.87758255
        %v729 = vsub.f32 %v609, -0.87758255
        %v730 = vsub.f32 %v610, -0.87758255
        %v731 = vsub.f32 %v611, -0.87758255
        %v732 = vsub.f32 %v612, -0.87758255
        %v733 = vsub.f32 %v613, -0.87758255
        %v734 = vsub.f32 %v614, -0.87758255
        %vm735 = vcmp.gt.f32.partialorder %v727, 0.0
        %vm736 = vcmp.gt.f32.partialorder %v728, 0.0
        %vm737 = vcmp.gt.f32.partialorder %v729, 0.0
        %vm738 = vcmp.gt.f32.partialorder %v730, 0.0
        %vm739 = vcmp.gt.f32.partialorder %v731, 0.0
        %vm740 = vcmp.gt.f32.partialorder %v732, 0.0
        %vm741 = vcmp.gt.f32.partialorder %v733, 0.0
        %vm742 = vcmp.gt.f32.partialorder %v734, 0.0
        %v743 = vsub.f32 %v695, 7.670809
        %v744 = vsub.f32 %v696, 7.670809
        %v745 = vsub.f32 %v697, 7.670809
        %v746 = vsub.f32 %v698, 7.670809
        %v747 = vsub.f32 %v699, 7.670809
        %v748 = vsub.f32 %v700, 7.670809
        %v749 = vsub.f32 %v701, 7.670809
        %v750 = vsub.f32 %v702, 7.670809
        %v751 = vsel %vm735, %v719, %v743
        %v752 = vsel %vm736, %v720, %v744
        %v753 = vsel %vm737, %v721, %v745
        %v754 = vsel %vm738, %v722, %v746
        %v755 = vsel %vm739, %v723, %v747
        %v756 = vsel %vm740, %v724, %v748
        %v757 = vsel %vm741, %v725, %v749
        %v758 = vsel %vm742, %v726, %v750
        %s759 = smul.u32 %s27, 512
        %v760 = vlaneseq
        %v761 = vand.u32 %v760, 127
        %v762 = vadd.s32 %v761, 128
        %v763 = vadd.s32 %v761, 256
        %v764 = vadd.s32 %v761, 384
        %v765 = vstv %s759
        %v766 = vadd.s32 %v765, %v761
        %v767 = vadd.s32 %v765, %v762
        %v768 = vadd.s32 %v765, %v763
        %v769 = vadd.s32 %v765, %v764
        %v770 = vld [vmem:[%s341] sm:$0xff]
        %v771 = vld [vmem:[%s341 + $0x8] sm:$0xff]
        %772 = vset.pattern.permute.xlu0 0
        %773 = vperm.xlu0 %772, %v770
        %v774 = vpop.permute.xlu0 %773
        %775 = vset.pattern.permute.xlu0 0
        %776 = vperm.xlu0 %775, %v771
        %v777 = vpop.permute.xlu0 %776
        %vm778 = vcmp.eq.s32.totalorder %v766, %v774
        %vm779 = vcmp.eq.s32.totalorder %v767, %v774
        %vm780 = vcmp.eq.s32.totalorder %v768, %v774
        %vm781 = vcmp.eq.s32.totalorder %v769, %v774
        %vm782 = vcmp.eq.s32.totalorder %v766, %v777
        %vm783 = vcmp.eq.s32.totalorder %v767, %v777
        %vm784 = vcmp.eq.s32.totalorder %v768, %v777
        %vm785 = vcmp.eq.s32.totalorder %v769, %v777
        %v786 = vsel %vm778, %v751, %v695
        %v787 = vsel %vm779, %v752, %v696
        %v788 = vsel %vm780, %v753, %v697
        %v789 = vsel %vm781, %v754, %v698
        %v790 = vsel %vm782, %v755, %v699
        %v791 = vsel %vm783, %v756, %v700
        %v792 = vsel %vm784, %v757, %v701
        %v793 = vsel %vm785, %v758, %v702
        %794 = vst [vmem:[%s318] sm:$0xff] %v786
        %795 = vst [vmem:[%s318 + $0x8] sm:$0xff] %v787
        %796 = vst [vmem:[%s318 + $0x10] sm:$0xff] %v788
        %797 = vst [vmem:[%s318 + $0x18] sm:$0xff] %v789
        %798 = vst [vmem:[%s318 + $0x20] sm:$0xff] %v790
        %799 = vst [vmem:[%s318 + $0x28] sm:$0xff] %v791
        %800 = vst [vmem:[%s318 + $0x30] sm:$0xff] %v792
        %801 = vst [vmem:[%s318 + $0x38] sm:$0xff] %v793
        %s802 = sand.u32 %s174, 1
        %s803 = scalar_lea.sflag [#allocation4], %s802
        %s804 = sand.u32 %s174, 1
        %s805 = smul.addr %s804, 64
        %s806 = scalar_lea.vmem [#allocation5], %s805
        // Predicated region
        $region45: #{tpu_custom_call.1} parent=39 // pred_check
          %p807 = pneg %p184
        $region46: #{tpu_custom_call.1} parent=39 // pred_check_branch
          %809 = sbr.rel (%p807) target = $region48
        $region47: #{tpu_custom_call.1} parent=39 // pred_region
          %s810 = smul.u32 2, %s26
          %s811 = smul.u32 4, %s27
          %s813 = ssub.s32 1024, 1024
          %814 = vsyncadd %s803, %s813
          %s815 = smul.addr %s810, 8
          %s816 = sadd.s32 %s811, %s815
          %s817 = smul.addr %s816, 128
          %s818 = scalar_lea.hbm %s5, %s817
          %s819 = sshll.u32 %s806, 4
          %s820 = int_to_ptr.vmem [resolvable:$true] %s819
          %825 = dma.vmem_to_hbm [thread:$0]  %s820, 1024, %s818, %s803, 512, 1024, 32
        $region48: #{tpu_custom_call.1} parent=39 // pred_fallthru
          _
      $region40: #{tpu_custom_call.1} parent=5 // pred_fallthru
        _
      %p826 = scmp.le.s32.totalorder 2, %s17
      // Predicated region
      $region49: #{tpu_custom_call.1} parent=5 // pred_check
        %p827 = pneg %p826
      $region50: #{tpu_custom_call.1} parent=5 // pred_check_branch
        %829 = sbr.rel (%p827) target = $region52
      $region51: #{tpu_custom_call.1} parent=5 // pred_region
        %s830 = ssub.s32 %s17, 2
        // Predicated region
        $region53: #{tpu_custom_call.1} parent=51 // pred_check
          %p831 = pneg %p190
        $region54: #{tpu_custom_call.1} parent=51 // pred_check_branch
          %833 = sbr.rel (%p831) target = $region56
        $region55: #{tpu_custom_call.1} parent=51 // pred_region
          %s834 = sand.u32 %s175, 1
          %s835 = scalar_lea.sflag [#allocation4], %s834
          %s836 = sand.u32 %s175, 1
          %s837 = smul.addr %s836, 64
          %s838 = scalar_lea.vmem [#allocation5], %s837
          %839 = dma.done %s835, 1024
        $region56: #{tpu_custom_call.1} parent=51 // pred_fallthru
          _
      $region52: #{tpu_custom_call.1} parent=5 // pred_fallthru
        _
    $region6: #{tpu_custom_call.1} parent=1 // loop_footer
      %s21 = sadd.s32 1, %s17
    $region7: #{tpu_custom_call.1} parent=1 // loop_footer_branch
      %16 = sbr.rel target = $region3
    $region8: #{tpu_custom_call.1} parent=1 // loop_exit
      _
    %840 = vsyncpa [#allocation3], 1
    %s841 = scalar_lea.sflag [#allocation3], 1
    %842 = vsyncpa %s841, 1
    %843 = vsyncpa [#allocation4], 1
    %s844 = scalar_lea.sflag [#allocation4], 1
    %845 = vsyncpa %s844, 1

</llo_original>
